<compile_context>
chip_gen: v6e
topology: v6e:2x2x1
jax: 0.10.0
libtpu: 0.0.40
codegen_flags: <defaults>
</compile_context>

<pallas_src>
import math

import numpy as np
import jax
import jax.numpy as jnp
from jax.experimental import pallas as pl
from jax.experimental.pallas import tpu as pltpu


def _drop_path_kernel(x_ref, m_ref, o_ref):
    # (TR, C) * (TR, 1) broadcast along lanes.  The f32 mask promotes the
    # multiply; the result is cast back to the output dtype.  Pure VPU stream.
    o_ref[...] = (x_ref[...] * m_ref[...]).astype(o_ref.dtype)


def _sublane_multiple(dtype) -> int:
    # Sub-32-bit dtypes pack 16/32 rows per vreg sublane group.
    itemsize = jnp.dtype(dtype).itemsize
    return {4: 8, 2: 16, 1: 32}.get(itemsize, 8)


def _pick_row_tile(rows: int, max_rows: int, sub: int) -> int:
    """Pick a row-tile size.

    Preference order:
      1. the whole extent when it fits the budget,
      2. the largest divisor of `rows` that is a multiple of `sub` and fits
         (balanced grid, no ragged edge block -> unmasked full-width stores),
      3. the budget rounded down to `sub` (ragged final block as fallback).
    """
    max_rows = max(sub, (max_rows // sub) * sub)
    if rows <= max_rows:
        return rows
    best = 0
    i = 1
    while i * i <= rows:
        if rows % i == 0:
            for d in (i, rows // i):
                if d % sub == 0 and d <= max_rows and d > best:
                    best = d
        i += 1
    return best if best > 0 else max_rows


def drop_path_pallas(x, key, drop_prob=0.0, training=False, scale_by_keep=True,
                     block_bytes=4 * 1024 * 1024, donate=False):
    """Functional drop_path matching the PyTorch reference semantics."""
    if drop_prob == 0.0 or not training:
        return x
    keep_prob = 1.0 - drop_prob

    b = x.shape[0]
    f = math.prod(x.shape[1:]) if x.ndim > 1 else 1

    # Per-sample mask computed ONCE in the wrapper (hoisted out of the kernel).
    # Kept in float32 so 1/keep_prob is not quantized for low-precision inputs.
    keep = jax.random.bernoulli(key, p=keep_prob, shape=(b,))
    scale = (1.0 / keep_prob) if (scale_by_keep and keep_prob > 0.0) else 1.0
    mask = jnp.where(keep, jnp.float32(scale), jnp.float32(0.0))  # (B,), f32

    # Lane-dense layout: pad the flattened feature dim to a multiple of 128
    # (rare non-128 case), fold a 128-multiple chunk into the lane axis and
    # flatten (sample, row) so sublanes stay dense even for tiny batches.
    x_flat = x.reshape(b, f)
    f_pad = -(-f // 128) * 128
    if f_pad != f:
        x_flat = jnp.pad(x_flat, ((0, 0), (0, f_pad - f)))
    cols = 128
    for c in (1024, 512, 256):
        if f_pad % c == 0:
            cols = c
            break
    r = f_pad // cols
    rows = b * r
    # Per-row copy of the per-sample mask (~4/(cols*itemsize) of x's traffic).
    row_mask = jnp.broadcast_to(mask[:, None, None], (b, r, 1)).reshape(rows, 1)
    x_r = x_flat.reshape(rows, cols)

    itemsize = jnp.dtype(x.dtype).itemsize
    sub = _sublane_multiple(x.dtype)

    max_rows = max(sub, block_bytes // max(1, cols * itemsize))
    # v7x has 2 TensorCores: when the whole tensor would fit in one block,
    # still split into >= 2 row tiles so the "parallel" axis can be sharded.
    if rows >= 2 * sub and max_rows >= rows:
        max_rows = ((-(-rows // 2) + sub - 1) // sub) * sub
    tr = _pick_row_tile(rows, max_rows, sub)
    grid = (pl.cdiv(rows, tr),)

    # VMEM budget: double-buffered in + out tiles plus the lane-padded (tr, 1)
    # f32 mask tiles, plus headroom; capped under v7x's 64 MiB physical VMEM.
    tile_bytes = tr * cols * itemsize
    mask_tile_bytes = tr * 128 * 4
    vmem_limit = int(min(48 << 20,
                         max(16 << 20,
                             2 * (2 * tile_bytes + mask_tile_bytes) + (2 << 20))))

    cost = pl.CostEstimate(
        flops=rows * cols,
        transcendentals=0,
        bytes_accessed=2 * rows * cols * itemsize + rows * 4,
    )

    out_r = pl.pallas_call(
        _drop_path_kernel,
        out_shape=jax.ShapeDtypeStruct((rows, cols), x.dtype),
        grid=grid,
        in_specs=[
            pl.BlockSpec((tr, cols), lambda i: (i, 0)),
            pl.BlockSpec((tr, 1), lambda i: (i, 0)),
        ],
        out_specs=pl.BlockSpec((tr, cols), lambda i: (i, 0)),
        # Alias only under true donation; aliasing a live (non-donated) x makes
        # XLA insert a defensive full copy -> ~2x HBM traffic.
        input_output_aliases=({0: 0} if donate else {}),
        compiler_params=pltpu.CompilerParams(
            dimension_semantics=("parallel",),    # megacore-shard row tiles
            vmem_limit_bytes=vmem_limit,
            allow_input_fusion=[True, False],     # let x's producer fuse in
        ),
        cost_estimate=cost,
    )(x_r, row_mask)

    out = out_r.reshape(b, f_pad)
    if f_pad != f:
        out = out[:, :f]
    return out.reshape(x.shape)


class DropPath:
    """Drop paths (Stochastic Depth) per sample — Pallas-backed."""

    def __init__(self, drop_prob: float = 0.0, scale_by_keep: bool = True):
        self.drop_prob = drop_prob
        self.scale_by_keep = scale_by_keep
        self.training = True  # no learnable parameters in this module

    def __call__(self, x, rng=0):
        # Accepts an int seed or a jax.random key.  NOTE: pass a distinct
        # seed/key per layer and per training step, otherwise every call draws
        # the same per-sample mask.
        key = jax.random.PRNGKey(rng) if isinstance(rng, int) else rng
        return drop_path_pallas(
            x, key, self.drop_prob, self.training, self.scale_by_keep
        )


if __name__ == "__main__":
    key = jax.random.PRNGKey(0)
    x = jax.random.normal(key, (2, 4, 16, 16), dtype=jnp.float32)  # NCHW

    drop_prob = 0.25
    keep_prob = 1.0 - drop_prob

    mod = DropPath(drop_prob=drop_prob, scale_by_keep=True)
    mod.training = True
    out = jax.block_until_ready(mod(x, rng=42))
    assert out.shape == x.shape and out.dtype == x.dtype

    out_np = np.asarray(out)
    x_np = np.asarray(x)
    # sanity: per-sample, output is either all-zero (dropped) or x / keep_prob
    for i in range(x_np.shape[0]):
        zeroed = np.allclose(out_np[i], 0.0)
        scaled = np.allclose(out_np[i], x_np[i] / keep_prob, rtol=1e-5, atol=1e-5)
        assert zeroed or scaled, "per-sample drop-path mask semantics violated"

    # exact check against the hoisted mask (same jax.random path as the wrapper)
    keep = jax.random.bernoulli(jax.random.PRNGKey(42), p=keep_prob, shape=(x.shape[0],))
    ref_mask = jnp.where(keep, jnp.float32(1.0 / keep_prob), jnp.float32(0.0))
    ref = np.asarray(x * ref_mask[:, None, None, None])
    assert np.allclose(out_np, ref, rtol=1e-6, atol=1e-6)

    # multi-block path: small block budget forces grid > 1 (ragged edge block)
    x2 = jax.random.normal(jax.random.PRNGKey(1), (2, 40, 16, 16), dtype=jnp.float32)
    out2 = jax.block_until_ready(
        drop_path_pallas(x2, jax.random.PRNGKey(3), drop_prob, True, True,
                         block_bytes=32 * 1024)
    )
    keep2 = jax.random.bernoulli(jax.random.PRNGKey(3), p=keep_prob, shape=(x2.shape[0],))
    mask2 = jnp.where(keep2, jnp.float32(1.0 / keep_prob), jnp.float32(0.0))
    ref2 = np.asarray(x2 * mask2[:, None, None, None])
    assert np.allclose(np.asarray(out2), ref2, rtol=1e-6, atol=1e-6)

    # non-128-multiple feature dim: exercises the pad-to-128 fallback
    x3 = jax.random.normal(jax.random.PRNGKey(2), (2, 3, 5, 7), dtype=jnp.float32)
    out3 = jax.block_until_ready(
        drop_path_pallas(x3, jax.random.PRNGKey(5), drop_prob, True, True)
    )
    keep3 = jax.random.bernoulli(jax.random.PRNGKey(5), p=keep_prob, shape=(x3.shape[0],))
    mask3 = jnp.where(keep3, jnp.float32(1.0 / keep_prob), jnp.float32(0.0))
    ref3 = np.asarray(x3 * mask3[:, None, None, None])
    assert np.allclose(np.asarray(out3), ref3, rtol=1e-6, atol=1e-6)

    # bf16 path: 16-row sublane rounding, f32 mask, >=2-tile grid split
    x4 = jax.random.normal(jax.random.PRNGKey(4), (4, 64, 16, 16),
                           dtype=jnp.float32).astype(jnp.bfloat16)
    out4 = jax.block_until_ready(
        drop_path_pallas(x4, jax.random.PRNGKey(6), drop_prob, True, True)
    )
    keep4 = jax.random.bernoulli(jax.random.PRNGKey(6), p=keep_prob, shape=(x4.shape[0],))
    mask4 = jnp.where(keep4, jnp.float32(1.0 / keep_prob), jnp.float32(0.0))
    ref4 = (x4 * mask4[:, None, None, None]).astype(jnp.bfloat16)
    assert out4.dtype == jnp.bfloat16
    assert np.allclose(np.asarray(out4.astype(jnp.float32)),
                       np.asarray(ref4.astype(jnp.float32)), rtol=1e-2, atol=1e-2)

    # eval mode (or drop_prob == 0) is the identity, as in the PyTorch code
    mod.training = False
    out_eval = jax.block_until_ready(mod(x, rng=42))
    assert np.allclose(np.asarray(out_eval), x_np)

    print("KERNEL_OK")
</pallas_src>

<mosaic_0001>
module attributes {stable_mosaic.version = 11 : i64} {
  func.func @_drop_path_kernel(%arg0: i32, %arg1: memref<2x1024xf32, #tpu.memory_space<vmem>>, %arg2: memref<2x1xf32, #tpu.memory_space<vmem>>, %arg3: memref<2x1024xf32, #tpu.memory_space<vmem>>) attributes {dimension_semantics = [#tpu.dimension_semantics<parallel>], iteration_bounds = array<i64: 1>, scalar_prefetch = 0 : i64, scratch_operands = 0 : i64, tpu.core_type = #tpu.core_type<tc>, window_params = [{transform_indices = @transform_0, window_bounds = array<i64: 2, 1024>}, {transform_indices = @transform_1, window_bounds = array<i64: 2, 1>}, {transform_indices = @transform_2, window_bounds = array<i64: 2, 1024>}]} {
    %c0 = arith.constant 0 : index
    %c0_0 = arith.constant 0 : index
    %0 = vector.load %arg1[%c0, %c0_0] : memref<2x1024xf32, #tpu.memory_space<vmem>>, vector<2x1024xf32>
    %c0_1 = arith.constant 0 : index
    %c0_2 = arith.constant 0 : index
    %1 = vector.load %arg2[%c0_1, %c0_2] : memref<2x1xf32, #tpu.memory_space<vmem>>, vector<2x1xf32>
    %2 = vector.broadcast %1 : vector<2x1xf32> to vector<2x1024xf32>
    %3 = arith.mulf %0, %2 : vector<2x1024xf32>
    %c0_3 = arith.constant 0 : index
    %c0_4 = arith.constant 0 : index
    %4 = vector.load %arg3[%c0_3, %c0_4] : memref<2x1024xf32, #tpu.memory_space<vmem>>, vector<2x1024xf32>
    tpu.vector_store %arg3[%c0_3, %c0_4], %3 {strides = array<i32>} : memref<2x1024xf32, #tpu.memory_space<vmem>>, vector<2x1024xf32>,
    return
  }
  func.func @transform_0(%arg0: i32) -> (i32, i32) {
    %c0_i32 = arith.constant 0 : i32
    %c0_i32_0 = arith.constant 0 : i32
    return %arg0, %c0_i32 : i32, i32
  }
  func.func @transform_1(%arg0: i32) -> (i32, i32) {
    %c0_i32 = arith.constant 0 : i32
    %c0_i32_0 = arith.constant 0 : i32
    return %arg0, %c0_i32 : i32, i32
  }
  func.func @transform_2(%arg0: i32) -> (i32, i32) {
    %c0_i32 = arith.constant 0 : i32
    %c0_i32_0 = arith.constant 0 : i32
    return %arg0, %c0_i32 : i32, i32
  }
}

</mosaic_0001>

<llo_original>
// kernel: tpu_custom_call.1
$region0: #{tpu_custom_call.1}
  #allocation0 [shape = 'u32[]', space=smem, size = 0x4, offset = 0x4, fixed_abs, tag = 'smem constant byte address 0x4 - core index']
  #allocation1 [shape = 'u32[144,128]{1,0:T(1,128)}', space=vmem, size = 0x12000, scoped, tag = 'internal scratch']
  %s0 = inlined_call_operand.hbm [shape: f32[2,1024], index: 0, kind: input, shape index: {}]
  %s1 = inlined_call_operand.vmem [shape: f32[2,1], index: 1, kind: input, shape index: {}]
  %s2 = inlined_call_operand.hbm [shape: f32[2,1024], index: 2, kind: output, shape index: {}]
  %s3 = sld [smem:[#allocation0]]
  $region22: #{tpu_custom_call.1} parent=0
    _
  %s5 = ssub.s32 1, %s3
  %s6 = scalar_select 0, %s5, %s3
  $region1: #{tpu_custom_call.1} parent=0
    #allocation2 [shape = 'u8[8192]{0}', space=vmem, size = 0x2000, scoped, tag = 'input window, operand 0, single buffered']
    #allocation3 [shape = 's32[1]{0}', space=sflag, size = 0x4, scoped, tag = 'scoped memory for tpu_custom_call.1']
    #allocation4 [shape = 's32[1]{0}', space=sflag, size = 0x4, scoped, tag = 'scoped memory for tpu_custom_call.1']
    #allocation5 [shape = 'u8[8192]{0}', space=vmem, size = 0x2000, scoped, tag = 'output window, operand 0, single buffered']
    %7 = vsyncpa [#allocation3], 0
    %8 = vsyncpa [#allocation4], 0
    // Predicated region
    $region2: #{tpu_custom_call.1} parent=1 // pred_check
      _
    $region3: #{tpu_custom_call.1} parent=1 // pred_check_branch
      %10 = sbr.rel (0) target = $region5
    $region4: #{tpu_custom_call.1} parent=1 // pred_region
      %s12 = ssub.s32 256, 256
      %13 = vsyncadd [#allocation3], %s12
      %s15 = sshll.u32 [#allocation2], 4
      %s16 = int_to_ptr.vmem [resolvable:$true] %s15
      %18 = dma.hbm_to_vmem [thread:$0]  %s0, 256, %s16, [#allocation3]
    $region5: #{tpu_custom_call.1} parent=1 // pred_fallthru
      _
    // Predicated region
    $region6: #{tpu_custom_call.1} parent=1 // pred_check
      _
    $region7: #{tpu_custom_call.1} parent=1 // pred_check_branch
      %20 = sbr.rel (0) target = $region9
    $region8: #{tpu_custom_call.1} parent=1 // pred_region
      _
    $region9: #{tpu_custom_call.1} parent=1 // pred_fallthru
      _
    // Predicated region
    $region10: #{tpu_custom_call.1} parent=1 // pred_check
      _
    $region11: #{tpu_custom_call.1} parent=1 // pred_check_branch
      %22 = sbr.rel (0) target = $region13
    $region12: #{tpu_custom_call.1} parent=1 // pred_region
      %23 = dma.done [#allocation3], 256
    $region13: #{tpu_custom_call.1} parent=1 // pred_fallthru
      _
    %v24 = vld [vmem:[#allocation2] sm:$0xff]
    %v25 = vld [vmem:[#allocation2 + $0x8] sm:$0xff]
    %v26 = vld [vmem:[%s1] sm:$0x3]
    %28 = vset.pattern.permute.xlu0 0
    %29 = vperm.xlu0 %28, %v26
    %v30 = vpop.permute.xlu0 %29
    %v32 = vunpack.c.l.s4 269488144
    %v33 = vunpack.c.0.s8 %v32
    %v34 = vlaneseq
    %v35 = vshrl.u32 %v34, 7
    %v36 = vsub.s32 %v33, %v35
    %v37 = vrot.slane %v30, %v36
    %v39 = vmul.f32 %v24, %v37
    %v40 = vmul.f32 %v25, %v37
    %41 = vst [vmem:[#allocation5] sm:$0xff] %v39
    %42 = vst [vmem:[#allocation5 + $0x8] sm:$0xff] %v40
    // Predicated region
    $region14: #{tpu_custom_call.1} parent=1 // pred_check
      _
    $region15: #{tpu_custom_call.1} parent=1 // pred_check_branch
      %44 = sbr.rel (0) target = $region17
    $region16: #{tpu_custom_call.1} parent=1 // pred_region
      %s46 = ssub.s32 256, 256
      %47 = vsyncadd [#allocation4], %s46
      %s49 = sshll.u32 [#allocation5], 4
      %s50 = int_to_ptr.vmem [resolvable:$true] %s49
      %52 = dma.vmem_to_hbm [thread:$0]  %s50, 256, %s2, [#allocation4]
    $region17: #{tpu_custom_call.1} parent=1 // pred_fallthru
      _
    // Predicated region
    $region18: #{tpu_custom_call.1} parent=1 // pred_check
      _
    $region19: #{tpu_custom_call.1} parent=1 // pred_check_branch
      %54 = sbr.rel (0) target = $region21
    $region20: #{tpu_custom_call.1} parent=1 // pred_region
      %55 = dma.done [#allocation4], 256
    $region21: #{tpu_custom_call.1} parent=1 // pred_fallthru
      _
    %56 = vsyncpa [#allocation3], 1
    %57 = vsyncpa [#allocation4], 1

</llo_original>
